<compile_context>
chip_gen: v6e
topology: v6e:2x2x1
jax: 0.10.0
libtpu: 0.0.40
codegen_flags: <defaults>
</compile_context>

<pallas_src>
import jax
import jax.numpy as jnp
from jax.experimental import pallas as pl
from jax.experimental.pallas import tpu as pltpu

_LANE = 128  # lane-dense output width (the 2-wide head output is padded to this)


def _round_up(a: int, b: int) -> int:
    return ((a + b - 1) // b) * b


def _pick_row_tile(M: int, max_tm: int) -> int:
    """Row tile: 1 step for tiny M, 2 steps for medium M (v7x 2-TC sharding),
    1024-row tiles for large M."""
    if M <= 128:
        return _round_up(M, 8)                     # single step, latency-bound
    if M <= max_tm:
        return _round_up(pl.cdiv(M, 2), 8)         # 2 steps -> both v7x TCs busy
    return max_tm


def _navi_head_kernel(x_ref, w1_ref, b1_ref, w2_ref, b2_ref, o_ref):
    # x_ref:  (tm, d_model)      f32 tile of flattened queries
    # w1_ref: (d_model, d_ffn)   bf16, resident every grid step
    # b1_ref: (1, d_ffn)         f32
    # w2_ref: (d_ffn, 128)       bf16, columns 2..127 are zero padding
    # b2_ref: (1, 128)           f32, columns 2..127 are zero padding
    # o_ref:  (tm, 128)          bf16, lane-dense output slab
    x = x_ref[...].astype(jnp.bfloat16)            # VPU cast, hidden under DMA
    h = jnp.dot(x, w1_ref[...], preferred_element_type=jnp.float32)
    h = jnp.maximum(h + b1_ref[...], 0.0)          # f32 bias + ReLU on the VPU
    out = jnp.dot(h.astype(jnp.bfloat16), w2_ref[...],
                  preferred_element_type=jnp.float32) + b2_ref[...]
    o_ref[...] = out.astype(o_ref.dtype)


def prepare_navi_head_weights(w1, b1, w2, b2):
    """One-time weight preparation (cast to bf16, pad the 2-wide head to 128 lanes).

    Call once at init and reuse the result for every forward so the cast/pad
    XLA ops do not run per call.
    """
    d_model, d_ffn = w1.shape
    w1_b = w1.astype(jnp.bfloat16)
    b1_2d = b1.reshape(1, d_ffn).astype(jnp.float32)
    w2_p = jnp.pad(w2.astype(jnp.bfloat16), ((0, 0), (0, _LANE - 2)))
    b2_p = jnp.pad(b2.reshape(1, 2).astype(jnp.float32), ((0, 0), (0, _LANE - 2)))
    return w1_b, b1_2d, w2_p, b2_p


def navi_head_forward(object_queries, prepared_weights, *, num_poses, max_tm=1024):
    """object_queries: (B, num_poses, d_model) float32.
    prepared_weights: output of prepare_navi_head_weights.

    Returns {'navi_point': (B, num_poses, 2)} matching the PyTorch module.
    """
    w1_b, b1_2d, w2_p, b2_p = prepared_weights
    B, P, d_model = object_queries.shape
    assert P == num_poses
    d_ffn = w1_b.shape[1]
    out_dtype = object_queries.dtype
    M = B * P

    x = object_queries.reshape(M, d_model)         # no cast, no pad in the wrapper

    tm = _pick_row_tile(M, max_tm)
    grid = (pl.cdiv(M, tm),)                       # trailing partial block is fine:
                                                   # OOB rows are never written back

    # Advisory cost estimate for XLA scheduling.
    flops = 2 * M * d_model * d_ffn + 2 * M * d_ffn * _LANE
    bytes_accessed = (M * d_model * 4              # x read (f32)
                      + d_model * d_ffn * 2 + d_ffn * 4   # layer-1 weights
                      + d_ffn * _LANE * 2 + _LANE * 4     # layer-2 weights (padded)
                      + M * _LANE * 2)             # output slab write (bf16)

    # VMEM budget: streamed tiles double-buffered, resident weights counted once,
    # plus margin; capped at 48 MiB to leave headroom on v7x's 64 MiB per-TC VMEM.
    x_tile_bytes = tm * d_model * 4
    out_tile_bytes = tm * _LANE * 2
    resident_bytes = (d_model * d_ffn * 2 + d_ffn * 4
                      + d_ffn * _LANE * 2 + _LANE * 4)
    vmem_needed = 2 * (x_tile_bytes + out_tile_bytes) + 2 * resident_bytes
    vmem_limit = int(min(max(vmem_needed + (4 << 20), 16 << 20), 48 << 20))

    out = pl.pallas_call(
        _navi_head_kernel,
        out_shape=jax.ShapeDtypeStruct((M, _LANE), jnp.bfloat16),
        grid_spec=pl.GridSpec(
            grid=grid,
            in_specs=[
                # x tile streams; if profiling shows exposed x DMA at large
                # d_model, add pipeline_mode=pl.Buffered(3) here only.
                pl.BlockSpec((tm, d_model), lambda i: (i, 0)),
                pl.BlockSpec((d_model, d_ffn), lambda i: (0, 0)),
                pl.BlockSpec((1, d_ffn), lambda i: (0, 0)),
                pl.BlockSpec((d_ffn, _LANE), lambda i: (0, 0)),
                pl.BlockSpec((1, _LANE), lambda i: (0, 0)),
            ],
            out_specs=pl.BlockSpec((tm, _LANE), lambda i: (i, 0)),
        ),
        compiler_params=pltpu.CompilerParams(
            dimension_semantics=("parallel",),
            vmem_limit_bytes=vmem_limit,
        ),
        cost_estimate=pl.CostEstimate(
            flops=flops, transcendentals=0, bytes_accessed=bytes_accessed),
    )(x, w1_b, b1_2d, w2_p, b2_p)

    poses = out[:, :2].astype(out_dtype).reshape(-1, num_poses, 2)
    return {"navi_point": poses}


def init_navi_head_params(key, d_model, d_ffn):
    """Deterministic synthetic params mimicking nn.Linear init (uniform +/- 1/sqrt(fan_in))."""
    k1, k2, k3, k4 = jax.random.split(key, 4)
    lim1 = 1.0 / jnp.sqrt(d_model)
    lim2 = 1.0 / jnp.sqrt(d_ffn)
    # stored as (in, out) so the kernel can use x @ W directly
    w1 = jax.random.uniform(k1, (d_model, d_ffn), jnp.float32, -lim1, lim1)
    b1 = jax.random.uniform(k2, (d_ffn,), jnp.float32, -lim1, lim1)
    w2 = jax.random.uniform(k3, (d_ffn, 2), jnp.float32, -lim2, lim2)
    b2 = jax.random.uniform(k4, (2,), jnp.float32, -lim2, lim2)
    return w1, b1, w2, b2


if __name__ == "__main__":
    # Small shapes consistent with the module's forward
    B, num_poses, d_model, d_ffn = 2, 8, 32, 64

    key = jax.random.PRNGKey(0)
    k_x, k_p = jax.random.split(key)
    object_queries = jax.random.normal(k_x, (B, num_poses, d_model), jnp.float32)
    w1, b1, w2, b2 = init_navi_head_params(k_p, d_model, d_ffn)

    prepared = prepare_navi_head_weights(w1, b1, w2, b2)   # one-time weight prep
    out = navi_head_forward(object_queries, prepared, num_poses=num_poses)
    navi_point = jax.block_until_ready(out["navi_point"])
    assert navi_point.shape == (B, num_poses, 2)
    assert navi_point.dtype == object_queries.dtype

    # Reference 1: same math as the kernel (bf16 MXU inputs, f32 acc, bf16 store).
    x32 = object_queries.reshape(-1, d_model)
    xb = x32.astype(jnp.bfloat16)
    h_ref = jnp.maximum(
        jnp.dot(xb, w1.astype(jnp.bfloat16), preferred_element_type=jnp.float32) + b1, 0.0)
    ref_bf16 = (jnp.dot(h_ref.astype(jnp.bfloat16), w2.astype(jnp.bfloat16),
                        preferred_element_type=jnp.float32) + b2)
    ref_bf16 = ref_bf16.astype(jnp.bfloat16).astype(jnp.float32).reshape(-1, num_poses, 2)
    assert jnp.allclose(navi_point, ref_bf16, atol=1e-2, rtol=1e-2)

    # Reference 2: full-f32 PyTorch-equivalent math (loose tol for bf16 matmuls).
    ref_f32 = (jnp.maximum(x32 @ w1 + b1, 0.0) @ w2 + b2).reshape(-1, num_poses, 2)
    assert jnp.allclose(navi_point, ref_f32, atol=5e-2, rtol=5e-2)

    print("KERNEL_OK")
</pallas_src>

<mosaic_0001>
module attributes {stable_mosaic.version = 11 : i64} {
  func.func @_navi_head_kernel(%arg0: i32, %arg1: memref<16x32xf32, #tpu.memory_space<vmem>>, %arg2: memref<32x64xbf16, #tpu.memory_space<vmem>>, %arg3: memref<1x64xf32, #tpu.memory_space<vmem>>, %arg4: memref<64x128xbf16, #tpu.memory_space<vmem>>, %arg5: memref<1x128xf32, #tpu.memory_space<vmem>>, %arg6: memref<16x128xbf16, #tpu.memory_space<vmem>>) attributes {dimension_semantics = [#tpu.dimension_semantics<parallel>], iteration_bounds = array<i64: 1>, scalar_prefetch = 0 : i64, scratch_operands = 0 : i64, tpu.core_type = #tpu.core_type<tc>, window_params = [{transform_indices = @transform_0, window_bounds = array<i64: 16, 32>}, {pipeline_mode = #tpu.pipeline_mode<synchronous>, transform_indices = @transform_1, window_bounds = array<i64: 32, 64>}, {pipeline_mode = #tpu.pipeline_mode<synchronous>, transform_indices = @transform_2, window_bounds = array<i64: 1, 64>}, {pipeline_mode = #tpu.pipeline_mode<synchronous>, transform_indices = @transform_3, window_bounds = array<i64: 64, 128>}, {pipeline_mode = #tpu.pipeline_mode<synchronous>, transform_indices = @transform_4, window_bounds = array<i64: 1, 128>}, {transform_indices = @transform_5, window_bounds = array<i64: 16, 128>}]} {
    %c0 = arith.constant 0 : index
    %c0_0 = arith.constant 0 : index
    %0 = vector.load %arg1[%c0, %c0_0] : memref<16x32xf32, #tpu.memory_space<vmem>>, vector<16x32xf32>
    %1 = arith.truncf %0 : vector<16x32xf32> to vector<16x32xbf16>
    %c0_1 = arith.constant 0 : index
    %c0_2 = arith.constant 0 : index
    %2 = vector.load %arg2[%c0_1, %c0_2] : memref<32x64xbf16, #tpu.memory_space<vmem>>, vector<32x64xbf16>
    %cst = arith.constant dense<0.000000e+00> : vector<16x64xf32>
    %3 = tpu.matmul %1, %2, %cst {dimension_numbers = #tpu.dot_dimension_numbers<[1], [0], [0], [1], [0, 0, 1, 1], [], []>} : vector<16x32xbf16>, vector<32x64xbf16>, vector<16x64xf32> -> vector<16x64xf32>
    %c0_3 = arith.constant 0 : index
    %c0_4 = arith.constant 0 : index
    %4 = vector.load %arg3[%c0_3, %c0_4] : memref<1x64xf32, #tpu.memory_space<vmem>>, vector<1x64xf32>
    %5 = vector.broadcast %4 : vector<1x64xf32> to vector<16x64xf32>
    %6 = arith.addf %3, %5 : vector<16x64xf32>
    %cst_5 = arith.constant 0.000000e+00 : f32
    %7 = vector.broadcast %cst_5 : f32 to vector<16x64xf32>
    %8 = arith.maximumf %6, %7 : vector<16x64xf32>
    %9 = arith.truncf %8 : vector<16x64xf32> to vector<16x64xbf16>
    %c0_6 = arith.constant 0 : index
    %c0_7 = arith.constant 0 : index
    %10 = vector.load %arg4[%c0_6, %c0_7] : memref<64x128xbf16, #tpu.memory_space<vmem>>, vector<64x128xbf16>
    %cst_8 = arith.constant dense<0.000000e+00> : vector<16x128xf32>
    %11 = tpu.matmul %9, %10, %cst_8 {dimension_numbers = #tpu.dot_dimension_numbers<[1], [0], [0], [1], [0, 0, 1, 1], [], []>} : vector<16x64xbf16>, vector<64x128xbf16>, vector<16x128xf32> -> vector<16x128xf32>
    %c0_9 = arith.constant 0 : index
    %c0_10 = arith.constant 0 : index
    %12 = vector.load %arg5[%c0_9, %c0_10] : memref<1x128xf32, #tpu.memory_space<vmem>>, vector<1x128xf32>
    %13 = vector.broadcast %12 : vector<1x128xf32> to vector<16x128xf32>
    %14 = arith.addf %11, %13 : vector<16x128xf32>
    %15 = arith.truncf %14 : vector<16x128xf32> to vector<16x128xbf16>
    %c0_11 = arith.constant 0 : index
    %c0_12 = arith.constant 0 : index
    %16 = vector.load %arg6[%c0_11, %c0_12] : memref<16x128xbf16, #tpu.memory_space<vmem>>, vector<16x128xbf16>
    tpu.vector_store %arg6[%c0_11, %c0_12], %15 {strides = array<i32>} : memref<16x128xbf16, #tpu.memory_space<vmem>>, vector<16x128xbf16>,
    return
  }
  func.func @transform_0(%arg0: i32) -> (i32, i32) {
    %c0_i32 = arith.constant 0 : i32
    %c0_i32_0 = arith.constant 0 : i32
    return %arg0, %c0_i32 : i32, i32
  }
  func.func @transform_1(%arg0: i32) -> (i32, i32) {
    %c0_i32 = arith.constant 0 : i32
    %c0_i32_0 = arith.constant 0 : i32
    %c0_i32_1 = arith.constant 0 : i32
    return %c0_i32, %c0_i32_0 : i32, i32
  }
  func.func @transform_2(%arg0: i32) -> (i32, i32) {
    %c0_i32 = arith.constant 0 : i32
    %c0_i32_0 = arith.constant 0 : i32
    %c0_i32_1 = arith.constant 0 : i32
    return %c0_i32, %c0_i32_0 : i32, i32
  }
  func.func @transform_3(%arg0: i32) -> (i32, i32) {
    %c0_i32 = arith.constant 0 : i32
    %c0_i32_0 = arith.constant 0 : i32
    %c0_i32_1 = arith.constant 0 : i32
    return %c0_i32, %c0_i32_0 : i32, i32
  }
  func.func @transform_4(%arg0: i32) -> (i32, i32) {
    %c0_i32 = arith.constant 0 : i32
    %c0_i32_0 = arith.constant 0 : i32
    %c0_i32_1 = arith.constant 0 : i32
    return %c0_i32, %c0_i32_0 : i32, i32
  }
  func.func @transform_5(%arg0: i32) -> (i32, i32) {
    %c0_i32 = arith.constant 0 : i32
    %c0_i32_0 = arith.constant 0 : i32
    return %arg0, %c0_i32 : i32, i32
  }
}

</mosaic_0001>

<llo_original>
// kernel: tpu_custom_call.1
$region0: #{tpu_custom_call.1}
  #allocation0 [shape = 'u32[]', space=smem, size = 0x4, offset = 0x4, fixed_abs, tag = 'smem constant byte address 0x4 - core index']
  #allocation1 [shape = 'u32[144,128]{1,0:T(1,128)}', space=vmem, size = 0x12000, scoped, tag = 'internal scratch']
  %s0 = inlined_call_operand.hbm [shape: f32[16,32], index: 0, kind: input, shape index: {}]
  %s1 = inlined_call_operand.hbm [shape: bf16[32,64], index: 1, kind: input, shape index: {}]
  %s2 = inlined_call_operand.vmem [shape: f32[1,64], index: 2, kind: input, shape index: {}]
  %s3 = inlined_call_operand.hbm [shape: bf16[64,128], index: 3, kind: input, shape index: {}]
  %s4 = inlined_call_operand.vmem [shape: f32[1,128], index: 4, kind: input, shape index: {}]
  %s5 = inlined_call_operand.hbm [shape: bf16[16,128], index: 5, kind: output, shape index: {}]
  %s6 = sld [smem:[#allocation0]]
  $region42: #{tpu_custom_call.1} parent=0
    _
  %s8 = ssub.s32 1, %s6
  %s9 = scalar_select 0, %s8, %s6
  $region1: #{tpu_custom_call.1} parent=0
    #allocation2 [shape = 'u8[8192]{0}', space=vmem, size = 0x2000, scoped, tag = 'input window, operand 0, single buffered']
    #allocation3 [shape = 's32[1]{0}', space=sflag, size = 0x4, scoped, tag = 'scoped memory for tpu_custom_call.1']
    #allocation4 [shape = 's32[1]{0}', space=sflag, size = 0x4, scoped, tag = 'scoped memory for tpu_custom_call.1']
    #allocation5 [shape = 'u8[8192]{0}', space=vmem, size = 0x2000, scoped, tag = 'input window, operand 1, single buffered']
    #allocation6 [shape = 's32[1]{0}', space=sflag, size = 0x4, scoped, tag = 'scoped memory for tpu_custom_call.1']
    #allocation7 [shape = 'u8[16384]{0}', space=vmem, size = 0x4000, scoped, tag = 'input window, operand 3, single buffered']
    #allocation8 [shape = 'u8[4096]{0}', space=vmem, size = 0x1000, scoped, tag = 'output window, operand 0, single buffered']
    %10 = vsyncpa [#allocation3], 0
    %11 = vsyncpa [#allocation6], 0
    %12 = vsyncpa [#allocation4], 0
    // Predicated region
    $region2: #{tpu_custom_call.1} parent=1 // pred_check
      _
    $region3: #{tpu_custom_call.1} parent=1 // pred_check_branch
      %14 = sbr.rel (0) target = $region5
    $region4: #{tpu_custom_call.1} parent=1 // pred_region
      %s16 = ssub.s32 256, 256
      %17 = vsyncadd [#allocation3], %s16
      %s18 = sshll.u32 [#allocation2], 4
      %s19 = int_to_ptr.vmem [resolvable:$true] %s18
      %24 = dma.hbm_to_vmem [thread:$0]  %s0, 256, %s19, [#allocation3], 128, 128, 8
    $region5: #{tpu_custom_call.1} parent=1 // pred_fallthru
      _
    // Predicated region
    $region6: #{tpu_custom_call.1} parent=1 // pred_check
      _
    $region7: #{tpu_custom_call.1} parent=1 // pred_check_branch
      %26 = sbr.rel (0) target = $region9
    $region8: #{tpu_custom_call.1} parent=1 // pred_region
      %s28 = ssub.s32 256, 256
      %29 = vsyncadd [#allocation6], %s28
      %s30 = sshll.u32 [#allocation5], 4
      %s31 = int_to_ptr.vmem [resolvable:$true] %s30
      %36 = dma.hbm_to_vmem [thread:$0]  %s1, 256, %s31, [#allocation6], 64, 64, 4
    $region9: #{tpu_custom_call.1} parent=1 // pred_fallthru
      _
    // Predicated region
    $region10: #{tpu_custom_call.1} parent=1 // pred_check
      _
    $region11: #{tpu_custom_call.1} parent=1 // pred_check_branch
      %38 = sbr.rel (0) target = $region13
    $region12: #{tpu_custom_call.1} parent=1 // pred_region
      _
    $region13: #{tpu_custom_call.1} parent=1 // pred_fallthru
      _
    // Predicated region
    $region14: #{tpu_custom_call.1} parent=1 // pred_check
      _
    $region15: #{tpu_custom_call.1} parent=1 // pred_check_branch
      %40 = sbr.rel (0) target = $region17
    $region16: #{tpu_custom_call.1} parent=1 // pred_region
      %s42 = ssub.s32 512, 512
      %43 = vsyncadd [#allocation6], %s42
      %s44 = sshll.u32 [#allocation7], 4
      %s45 = int_to_ptr.vmem [resolvable:$true] %s44
      %50 = dma.hbm_to_vmem [thread:$0]  %s3, 512, %s45, [#allocation6], 64, 64, 4
    $region17: #{tpu_custom_call.1} parent=1 // pred_fallthru
      _
    // Predicated region
    $region18: #{tpu_custom_call.1} parent=1 // pred_check
      _
    $region19: #{tpu_custom_call.1} parent=1 // pred_check_branch
      %52 = sbr.rel (0) target = $region21
    $region20: #{tpu_custom_call.1} parent=1 // pred_region
      _
    $region21: #{tpu_custom_call.1} parent=1 // pred_fallthru
      _
    // Predicated region
    $region22: #{tpu_custom_call.1} parent=1 // pred_check
      _
    $region23: #{tpu_custom_call.1} parent=1 // pred_check_branch
      %54 = sbr.rel (0) target = $region25
    $region24: #{tpu_custom_call.1} parent=1 // pred_region
      %55 = dma.done [#allocation3], 256
    $region25: #{tpu_custom_call.1} parent=1 // pred_fallthru
      _
    // Predicated region
    $region26: #{tpu_custom_call.1} parent=1 // pred_check
      _
    $region27: #{tpu_custom_call.1} parent=1 // pred_check_branch
      %57 = sbr.rel (0) target = $region29
    $region28: #{tpu_custom_call.1} parent=1 // pred_region
      %58 = dma.done [#allocation6], 256
    $region29: #{tpu_custom_call.1} parent=1 // pred_fallthru
      _
    // Predicated region
    $region30: #{tpu_custom_call.1} parent=1 // pred_check
      _
    $region31: #{tpu_custom_call.1} parent=1 // pred_check_branch
      %60 = sbr.rel (0) target = $region33
    $region32: #{tpu_custom_call.1} parent=1 // pred_region
      %61 = dma.done [#allocation6], 512
    $region33: #{tpu_custom_call.1} parent=1 // pred_fallthru
      _
    %v63 = vld [vmem:[#allocation2] sm:$0xff]
    %v64 = vld [vmem:[#allocation2 + $0x8] sm:$0xff]
    %v65 = vpack.c.bf16 %v64, %v63
    %v66 = vld [vmem:[#allocation5] sm:$0xf]
    %v67 = vld [vmem:[#allocation5 + $0x4] sm:$0xf]
    %v68 = vld [vmem:[#allocation5 + $0x8] sm:$0xf]
    %v69 = vld [vmem:[#allocation5 + $0xc] sm:$0xf]
    %v70 = vld [vmem:[%s2] sm:$0x1]
    %v72 = vlaneseq
    %v73 = vshrl.u32 %v72, 7
    %v74 = vsub.s32 0, %v73
    %v75 = vrot.slane %v70, %v74
    %v81 = vunpack.c.l.b16 %v66
    %v82 = vunpack.c.l.b16 %v67
    %v83 = vunpack.c.l.b16 %v68
    %v84 = vunpack.c.l.b16 %v69
    %v85 = vpack.c.b16 %v82, %v81
    %v86 = vpack.c.b16 %v84, %v83
    %vm89 = vcmask 261120
    %v91 = vsel %vm89, %v65, 0
    %93 = vmatprep.subr.bf16.mxu0 0
    %94 = vmatpush1.bf16.msra.mxu0 0
    %95 = vmatprep.subr.bf16.mxu0 0
    %96 = vmatpush1.bf16.msra.mxu0 0
    %97 = vmatprep.subr.bf16.mxu0 0
    %98 = vmatpush1.bf16.msra.mxu0 0
    %99 = vmatprep.subr.bf16.mxu0 0
    %100 = vmatpush1.bf16.msra.mxu0 0
    %101 = vmatprep.subr.bf16.mxu0 0
    %102 = vmatpush1.bf16.msra.mxu0 0
    %103 = vmatprep.subr.bf16.mxu0 0
    %104 = vmatpush1.bf16.msra.mxu0 0
    %105 = vmatprep.subr.bf16.mxu0 0
    %106 = vmatpush1.bf16.msra.mxu0 %v86
    %107 = vmatprep.subr.bf16.mxu0 0
    %108 = vmatpush1.bf16.msra.mxu0 %v85
    %109 = vmatprep.subr.bf16.mxu0 0
    %110 = vmatpush2.bf16.msra.mxu0 0
    %111 = vmatprep.subr.bf16.mxu0 0
    %112 = vmatpush2.bf16.msra.mxu0 0
    %113 = vmatprep.subr.bf16.mxu0 0
    %114 = vmatpush2.bf16.msra.mxu0 0
    %115 = vmatprep.subr.bf16.mxu0 0
    %116 = vmatpush2.bf16.msra.mxu0 0
    %117 = vmatprep.subr.bf16.mxu0 0
    %118 = vmatpush2.bf16.msra.mxu0 0
    %119 = vmatprep.subr.bf16.mxu0 0
    %120 = vmatpush2.bf16.msra.mxu0 0
    %121 = vmatprep.subr.bf16.mxu0 0
    %122 = vmatpush2.bf16.msra.mxu0 0
    %123 = vmatprep.subr.bf16.mxu0 0
    %124 = vmatpush2.bf16.msra.mxu0 0
    %125 = vmatprep.mubr.bf16.mxu0 0
    %126 = vmatmul.mubr.bf16.gmra.mxu0 %v91
    %v127 = vpop.f32.mrf.mxu0
    %v128 = vadd.f32 %v75, %v127
    %v129 = vpop.f32.mrf.mxu0
    %v130 = vpop.f32.mrf.mxu0
    %v131 = vadd.f32 %v75, %v130
    %v132 = vpop.f32.mrf.mxu0
    %133 = vdwg.mxu0
    %v134 = vmax.f32 %v128, 0.0
    %v135 = vmax.f32 %v131, 0.0
    %v136 = vpack.c.bf16 %v135, %v134
    %v137 = vld [vmem:[#allocation7] sm:$0xf]
    %v138 = vld [vmem:[#allocation7 + $0x4] sm:$0xf]
    %v139 = vld [vmem:[#allocation7 + $0x8] sm:$0xf]
    %v140 = vld [vmem:[#allocation7 + $0xc] sm:$0xf]
    %v141 = vld [vmem:[#allocation7 + $0x10] sm:$0xf]
    %v142 = vld [vmem:[#allocation7 + $0x14] sm:$0xf]
    %v143 = vld [vmem:[#allocation7 + $0x18] sm:$0xf]
    %v144 = vld [vmem:[#allocation7 + $0x1c] sm:$0xf]
    %v145 = vld [vmem:[%s4] sm:$0x1]
    %v147 = vlaneseq
    %v148 = vshrl.u32 %v147, 7
    %v149 = vsub.s32 0, %v148
    %v150 = vrot.slane %v145, %v149
    %v160 = vunpack.c.l.b16 %v137
    %v161 = vunpack.c.l.b16 %v138
    %v162 = vunpack.c.l.b16 %v139
    %v163 = vunpack.c.l.b16 %v140
    %v164 = vunpack.c.l.b16 %v141
    %v165 = vunpack.c.l.b16 %v142
    %v166 = vunpack.c.l.b16 %v143
    %v167 = vunpack.c.l.b16 %v144
    %v168 = vpack.c.b16 %v161, %v160
    %v169 = vpack.c.b16 %v163, %v162
    %v170 = vpack.c.b16 %v165, %v164
    %v171 = vpack.c.b16 %v167, %v166
    %vm176 = vcmask 523264
    %v178 = vsel %vm176, %v136, 0
    %180 = vmatprep.subr.bf16.mxu0 0
    %181 = vmatpush1.bf16.msra.mxu0 0
    %182 = vmatprep.subr.bf16.mxu0 0
    %183 = vmatpush1.bf16.msra.mxu0 0
    %184 = vmatprep.subr.bf16.mxu0 0
    %185 = vmatpush1.bf16.msra.mxu0 0
    %186 = vmatprep.subr.bf16.mxu0 0
    %187 = vmatpush1.bf16.msra.mxu0 0
    %188 = vmatprep.subr.bf16.mxu0 0
    %189 = vmatpush1.bf16.msra.mxu0 %v171
    %190 = vmatprep.subr.bf16.mxu0 0
    %191 = vmatpush1.bf16.msra.mxu0 %v170
    %192 = vmatprep.subr.bf16.mxu0 0
    %193 = vmatpush1.bf16.msra.mxu0 %v169
    %194 = vmatprep.subr.bf16.mxu0 0
    %195 = vmatpush1.bf16.msra.mxu0 %v168
    %196 = vmatprep.subr.bf16.mxu0 0
    %197 = vmatpush2.bf16.msra.mxu0 0
    %198 = vmatprep.subr.bf16.mxu0 0
    %199 = vmatpush2.bf16.msra.mxu0 0
    %200 = vmatprep.subr.bf16.mxu0 0
    %201 = vmatpush2.bf16.msra.mxu0 0
    %202 = vmatprep.subr.bf16.mxu0 0
    %203 = vmatpush2.bf16.msra.mxu0 0
    %204 = vmatprep.subr.bf16.mxu0 0
    %205 = vmatpush2.bf16.msra.mxu0 0
    %206 = vmatprep.subr.bf16.mxu0 0
    %207 = vmatpush2.bf16.msra.mxu0 0
    %208 = vmatprep.subr.bf16.mxu0 0
    %209 = vmatpush2.bf16.msra.mxu0 0
    %210 = vmatprep.subr.bf16.mxu0 0
    %211 = vmatpush2.bf16.msra.mxu0 0
    %212 = vmatprep.mubr.bf16.mxu0 0
    %213 = vmatmul.mubr.bf16.gmra.mxu0 %v178
    %v214 = vpop.f32.mrf.mxu0
    %v215 = vadd.f32 %v150, %v214
    %v216 = vpop.f32.mrf.mxu0
    %v217 = vpop.f32.mrf.mxu0
    %v218 = vadd.f32 %v150, %v217
    %v219 = vpop.f32.mrf.mxu0
    %220 = vdwg.mxu0
    %v221 = vpack.c.bf16 %v218, %v215
    %v223 = vunpack.c.l.b16 %v221
    %v224 = vunpack.c.h.b16 %v221
    %v225 = vpack.c.b16 %v223, %v223
    %v226 = vpack.c.b16 %v224, %v224
    %229 = vst [vmem:[#allocation8] sm:$0xf] %v225
    %230 = vst [vmem:[#allocation8 + $0x4] sm:$0xf] %v226
    // Predicated region
    $region34: #{tpu_custom_call.1} parent=1 // pred_check
      _
    $region35: #{tpu_custom_call.1} parent=1 // pred_check_branch
      %232 = sbr.rel (0) target = $region37
    $region36: #{tpu_custom_call.1} parent=1 // pred_region
      %s234 = ssub.s32 128, 128
      %235 = vsyncadd [#allocation4], %s234
      %s236 = sshll.u32 [#allocation8], 4
      %s237 = int_to_ptr.vmem [resolvable:$true] %s236
      %242 = dma.vmem_to_hbm [thread:$0]  %s237, 128, %s5, [#allocation4], 64, 64, 4
    $region37: #{tpu_custom_call.1} parent=1 // pred_fallthru
      _
    // Predicated region
    $region38: #{tpu_custom_call.1} parent=1 // pred_check
      _
    $region39: #{tpu_custom_call.1} parent=1 // pred_check_branch
      %244 = sbr.rel (0) target = $region41
    $region40: #{tpu_custom_call.1} parent=1 // pred_region
      %245 = dma.done [#allocation4], 128
    $region41: #{tpu_custom_call.1} parent=1 // pred_fallthru
      _
    %246 = vsyncpa [#allocation3], 1
    %247 = vsyncpa [#allocation6], 1
    %248 = vsyncpa [#allocation4], 1

</llo_original>
